<compile_context>
chip_gen: v7x
topology: tpu7x:2x2x1
jax: 0.10.0
libtpu: 0.0.40
codegen_flags: <defaults>
</compile_context>

<pallas_src>
import math

import jax
import jax.numpy as jnp
from jax import lax
from jax.experimental import pallas as pl
from jax.experimental.pallas import tpu as pltpu


def _make_kernel(compute_dtype, with_attention):
    cdt = compute_dtype

    def kernel(params_ref, q_ref, ctx_ref, dt_ref, tri_ref,
               w_in_ref, w_out_a_ref, w_out_b_ref, out_ref, *attn_refs):
        # params_ref : (2,) f32 in SMEM -> [ae, ab]
        # q_ref      : (Bt*L, D)    folded query rows (compute dtype)
        # ctx_ref    : (Bt, L, D)   context (per-batch bmm's need 3-D)
        # dt_ref     : (Bt, L, 1)   delta_t (f32)
        # tri_ref    : (Bt, L, L)   lower-triangular ones (resident, tiny)
        # w_*        : (D, D)       resident weight tiles
        Bt, L, D = ctx_ref.shape
        M = Bt * L

        ae = params_ref[0]
        ab = params_ref[1]

        ctx3 = ctx_ref[...]                                         # (Bt, L, D)

        # --- linear_in (attention_type='general'): folded (M, D) @ W_in^T ----
        dn2 = (((1,), (1,)), ((), ()))                              # x @ W^T
        qg2 = lax.dot_general(q_ref[...], w_in_ref[...], dn2,
                              preferred_element_type=jnp.float32)   # (M, D) f32
        qg3 = qg2.reshape(Bt, L, D)

        # --- attention scores + flash-style softmax (f32 exp / accumulate) ----
        dnb_scores = (((2,), (2,)), ((0,), (0,)))                   # q @ ctx^T per batch
        scores = lax.dot_general(qg3.astype(cdt), ctx3, dnb_scores,
                                 preferred_element_type=jnp.float32)  # (Bt, L, L)
        m = jnp.max(scores, axis=-1, keepdims=True)
        e = jnp.exp(scores - m)                                     # (Bt, L, L) f32
        denom = jnp.sum(e, axis=-1, keepdims=True)                  # (Bt, L, 1)
        inv = pl.reciprocal(denom, approx=True)                     # EUP slot

        # --- mix carried transposed: mixT[b] = e[b] @ ctx[b], rescaled after --
        dnb_mix = (((2,), (1,)), ((0,), (0,)))
        mixT = lax.dot_general(e.astype(cdt), ctx3, dnb_mix,
                               preferred_element_type=jnp.float32)  # (Bt, L, D) f32
        mixT = mixT * inv                                           # normalize on D side

        # --- Hawkes decay + relu (f32, VPU/EUP); ae folded into decay ---------
        scale = ae * jnp.exp(dt_ref[...] * (-ab))                   # (Bt, L, 1) f32
        s3 = jnp.maximum(mixT * scale, 0.0) + mixT                  # (Bt, L, D) f32

        # --- cumsum over L: batched lower-tri matmul (only useful MACs) -------
        dnb_tri = (((2,), (1,)), ((0,), (0,)))
        mix2_3 = lax.dot_general(tri_ref[...], s3.astype(cdt), dnb_tri,
                                 preferred_element_type=jnp.float32)  # (Bt, L, D)
        mix2 = mix2_3.reshape(M, D)                                 # (M, D) f32

        # --- linear_out(cat(mix2, qg)) = mix2 @ Wa^T + qg @ Wb^T, then tanh ---
        out = lax.dot_general(mix2.astype(cdt), w_out_a_ref[...], dn2,
                              preferred_element_type=jnp.float32)
        out = out + lax.dot_general(qg2.astype(cdt), w_out_b_ref[...], dn2,
                                    preferred_element_type=jnp.float32)
        out_ref[...] = jnp.tanh(out).astype(out_ref.dtype)

        if with_attention:
            attn_refs[0][...] = (e * inv).astype(attn_refs[0].dtype)

    return kernel


def _pick_block_batch(B, L, *, target_rows=512):
    """Batch items per grid step.

    Targets ~512 folded rows (amortizes the ~0.35us/step pipeline overhead) and
    guarantees >= 2 grid blocks when B >= 2 so both of v7x's TensorCores get
    work (dimension_semantics=("parallel",) shards the grid).  The extra grid
    step costs ~0.35us on single-TC chips (v5e/v6e) -- negligible.
    """
    bt = max(1, target_rows // max(L, 1))
    if B >= 2:
        bt = min(bt, (B + 1) // 2)
    return max(1, min(bt, B))


def _cap_block_batch_for_vmem(Bt, L, D, cdt_bytes, out_bytes, attn_bytes,
                              budget_bytes=24 << 20):
    """Shrink Bt until the per-step footprint fits a conservative VMEM budget.

    Counts double-buffered streamed blocks, the (now tiny) resident tiles and a
    rough allowance for in-kernel f32 temporaries.  24 MiB stays safely inside
    the 32 MiB default scoped limit (and v7x's 64 MiB physical VMEM).
    """
    while Bt > 1:
        M = Bt * L
        streamed = (M * D * cdt_bytes           # folded query block
                    + Bt * L * D * cdt_bytes    # context block
                    + Bt * L * 4                # delta_t block (f32)
                    + M * D * out_bytes         # output block
                    + Bt * L * L * attn_bytes)  # attention block (0 if disabled)
        resident = Bt * L * L * cdt_bytes + 3 * D * D * cdt_bytes
        temps = 5 * M * D * 4 + 3 * Bt * L * L * 4   # f32 intermediates (rough)
        if 2 * streamed + resident + temps <= budget_bytes:
            return Bt
        Bt = max(1, Bt // 2)
    return Bt


def attention_hawkes(query, context, delta_t, w_in, w_out, ae, ab, *,
                     mxu_dtype=jnp.bfloat16, return_attention=True,
                     attn_dtype=jnp.float32, block_batch=None):
    """Pallas TPU AttentionHawkes.forward (output_len > 1 branch, L == Q)."""
    B, L, D = query.shape
    Q = context.shape[1]
    assert L == Q, "the PyTorch broadcast (mix * bt) requires output_len == query_len"

    cdt = jnp.dtype(mxu_dtype)
    out_dt = jnp.dtype(query.dtype)
    attn_dt = jnp.dtype(attn_dtype)

    Bt = int(block_batch) if block_batch is not None else _pick_block_batch(B, L)
    Bt = max(1, min(Bt, B))
    Bt = _cap_block_batch_for_vmem(
        Bt, L, D, cdt.itemsize, out_dt.itemsize,
        attn_dt.itemsize if return_attention else 0)
    if Bt < B and (Bt * L) % 8 != 0:
        # keep the folded row block an (8,*) sublane multiple when it doesn't
        # cover the whole (padded) batch
        g = 8 // math.gcd(L, 8)
        Bt = min(B, -(-Bt // g) * g)
    n_blocks = -(-B // Bt)
    Bp = n_blocks * Bt
    pad = Bp - B
    M = Bt * L

    # MXU-only inputs are stored in the compute dtype; delta_t (exp) stays f32.
    q2 = query.reshape(B * L, D).astype(cdt)
    ctx = context.astype(cdt)
    dt3 = delta_t.reshape(B, L, 1).astype(jnp.float32)
    if pad:
        q2 = jnp.concatenate([q2, jnp.zeros((pad * L, D), cdt)], axis=0)
        ctx = jnp.concatenate([ctx, jnp.zeros((pad, L, D), cdt)], axis=0)
        dt3 = jnp.concatenate([dt3, jnp.zeros((pad, L, 1), jnp.float32)], axis=0)

    w_in_c = w_in.astype(cdt)
    w_out_a = w_out[:, :D].astype(cdt)        # multiplies the mix part
    w_out_b = w_out[:, D:].astype(cdt)        # multiplies the projected-query part
    params = jnp.asarray([ae, ab], jnp.float32)             # -> SMEM scalars

    # Lower-triangular ones, shared across the batch tile: cumsum over L as one
    # batched (L, L) @ (L, D) matmul -- only Bt*L^2*D useful MACs, tiny resident.
    tri = jnp.broadcast_to(jnp.tril(jnp.ones((L, L), jnp.float32)),
                           (Bt, L, L)).astype(cdt)

    kernel = _make_kernel(cdt, return_attention)

    out_struct = jax.ShapeDtypeStruct((Bp * L, D), out_dt)
    attn_struct = jax.ShapeDtypeStruct((Bp, L, Q), attn_dt)
    out_spec = pl.BlockSpec((M, D), lambda b: (b, 0))
    attn_spec = pl.BlockSpec((Bt, L, Q), lambda b: (b, 0, 0))
    if return_attention:
        out_shape = (out_struct, attn_struct)
        out_specs = [out_spec, attn_spec]
    else:
        out_shape = out_struct
        out_specs = out_spec

    result = pl.pallas_call(
        kernel,
        out_shape=out_shape,
        grid_spec=pltpu.PrefetchScalarGridSpec(
            num_scalar_prefetch=0,
            grid=(n_blocks,),
            in_specs=[
                pl.BlockSpec(memory_space=pltpu.MemorySpace.SMEM),  # [ae, ab]
                pl.BlockSpec((M, D), lambda b: (b, 0)),             # folded query
                pl.BlockSpec((Bt, L, D), lambda b: (b, 0, 0)),      # context
                pl.BlockSpec((Bt, L, 1), lambda b: (b, 0, 0)),      # delta_t
                pl.BlockSpec((Bt, L, L), lambda b: (0, 0, 0)),      # tri (resident)
                pl.BlockSpec((D, D), lambda b: (0, 0)),             # W_in (resident)
                pl.BlockSpec((D, D), lambda b: (0, 0)),             # W_out[:, :D]
                pl.BlockSpec((D, D), lambda b: (0, 0)),             # W_out[:, D:]
            ],
            out_specs=out_specs,
        ),
        compiler_params=pltpu.CompilerParams(
            dimension_semantics=("parallel",),
            vmem_limit_bytes=32 * 1024 * 1024,
        ),
    )(params, q2, ctx, dt3, tri, w_in_c, w_out_a, w_out_b)

    if return_attention:
        out_flat, attn = result
        return out_flat[:B * L].reshape(B, L, D), attn[:B]
    return result[:B * L].reshape(B, L, D)


def attention_hawkes_ref(query, context, delta_t, w_in, w_out, ae, ab):
    """Pure-JAX reference mirroring the PyTorch forward (output_len > 1 branch)."""
    B, L, D = query.shape
    Q = context.shape[1]
    q = (query.reshape(B * L, D) @ w_in.T).reshape(B, L, D)
    scores = jnp.einsum('bld,bqd->blq', q, context)
    w = jax.nn.softmax(scores, axis=-1)
    mix = jnp.einsum('bqd,blq->bdl', context, w)                             # (B, D, L)
    bt = jnp.exp(-ab * delta_t.reshape(B, Q, 1).transpose(0, 2, 1))          # (B, 1, Q)
    term2 = jax.nn.relu(ae * mix * bt)
    mix2 = jnp.cumsum(term2 + mix, axis=-1).transpose(0, 2, 1)               # (B, L, D)
    combined = jnp.concatenate([mix2, q], axis=2).reshape(B * L, 2 * D)
    out = jnp.tanh((combined @ w_out.T).reshape(B, L, D))
    return out, w


if __name__ == "__main__":
    key = jax.random.PRNGKey(0)
    k1, k2, k3, k4, k5 = jax.random.split(key, 5)

    B, L, D = 2, 8, 32
    query = jax.random.normal(k1, (B, L, D), jnp.float32)
    context = jax.random.normal(k2, (B, L, D), jnp.float32)
    delta_t = jax.random.uniform(k3, (B, L), jnp.float32)
    w_in = jax.random.normal(k4, (D, D), jnp.float32) * 0.1        # linear_in.weight
    w_out = jax.random.normal(k5, (D, 2 * D), jnp.float32) * 0.1   # linear_out.weight
    ae = jnp.float32(1.0)
    ab = jnp.float32(1.0)

    ref_out, ref_attn = attention_hawkes_ref(query, context, delta_t, w_in, w_out, ae, ab)

    # f32-MXU path: strict numerical check.
    out32, attn32 = attention_hawkes(query, context, delta_t, w_in, w_out, ae, ab,
                                     mxu_dtype=jnp.float32)
    jax.block_until_ready((out32, attn32))
    assert out32.shape == (B, L, D) and attn32.shape == (B, L, L)
    assert jnp.allclose(out32, ref_out, atol=2e-2, rtol=2e-2)
    assert jnp.allclose(attn32, ref_attn, atol=2e-2, rtol=2e-2)

    # Default bf16-MXU path (all generations): reduced precision on the MXU
    # operands (softmax/exp/relu/tanh and accumulation stay f32), so it is
    # checked against loose bf16-appropriate bounds; attention emitted in bf16.
    outbf, attnbf = attention_hawkes(query, context, delta_t, w_in, w_out, ae, ab,
                                     attn_dtype=jnp.bfloat16)
    jax.block_until_ready((outbf, attnbf))
    assert outbf.shape == (B, L, D) and attnbf.shape == (B, L, L)
    assert float(jnp.max(jnp.abs(outbf.astype(jnp.float32) - ref_out))) < 2e-1
    assert float(jnp.max(jnp.abs(attnbf.astype(jnp.float32) - ref_attn))) < 1e-1

    # return_attention=False path (drops the L^2 HBM stream entirely).
    out_only = attention_hawkes(query, context, delta_t, w_in, w_out, ae, ab,
                                mxu_dtype=jnp.float32, return_attention=False)
    jax.block_until_ready(out_only)
    assert out_only.shape == (B, L, D)
    assert jnp.allclose(out_only, ref_out, atol=2e-2, rtol=2e-2)

    # Multi-block grid + batch padding path (forces Bt < B), strict f32 check.
    B2 = 20
    kq, kc, kd = jax.random.split(jax.random.PRNGKey(1), 3)
    query2 = jax.random.normal(kq, (B2, L, D), jnp.float32)
    context2 = jax.random.normal(kc, (B2, L, D), jnp.float32)
    delta_t2 = jax.random.uniform(kd, (B2, L), jnp.float32)
    out2, attn2 = attention_hawkes(query2, context2, delta_t2, w_in, w_out, ae, ab,
                                   mxu_dtype=jnp.float32, block_batch=8)
    jax.block_until_ready((out2, attn2))
    ref_out2, ref_attn2 = attention_hawkes_ref(query2, context2, delta_t2, w_in, w_out, ae, ab)
    assert out2.shape == (B2, L, D) and attn2.shape == (B2, L, L)
    assert jnp.allclose(out2, ref_out2, atol=2e-2, rtol=2e-2)
    assert jnp.allclose(attn2, ref_attn2, atol=2e-2, rtol=2e-2)

    print("KERNEL_OK")
</pallas_src>

<mosaic_0001>
module attributes {stable_mosaic.version = 11 : i64} {
  func.func @kernel(%arg0: i32, %arg1: memref<2xf32, #tpu.memory_space<smem>>, %arg2: memref<8x32xf32, #tpu.memory_space<vmem>>, %arg3: memref<1x8x32xf32, #tpu.memory_space<vmem>>, %arg4: memref<1x8x1xf32, #tpu.memory_space<vmem>>, %arg5: memref<1x8x8xf32, #tpu.memory_space<vmem>>, %arg6: memref<32x32xf32, #tpu.memory_space<vmem>>, %arg7: memref<32x32xf32, #tpu.memory_space<vmem>>, %arg8: memref<32x32xf32, #tpu.memory_space<vmem>>, %arg9: memref<8x32xf32, #tpu.memory_space<vmem>>, %arg10: memref<1x8x8xf32, #tpu.memory_space<vmem>>) attributes {dimension_semantics = [#tpu.dimension_semantics<parallel>], iteration_bounds = array<i64: 2>, scalar_prefetch = 0 : i64, scratch_operands = 0 : i64, tpu.core_type = #tpu.core_type<tc>, window_params = [{transform_indices = @transform_0, window_bounds = array<i64: 2>}, {transform_indices = @transform_1, window_bounds = array<i64: 8, 32>}, {transform_indices = @transform_2, window_bounds = array<i64: 1, 8, 32>}, {transform_indices = @transform_3, window_bounds = array<i64: 1, 8, 1>}, {pipeline_mode = #tpu.pipeline_mode<synchronous>, transform_indices = @transform_4, window_bounds = array<i64: 1, 8, 8>}, {pipeline_mode = #tpu.pipeline_mode<synchronous>, transform_indices = @transform_5, window_bounds = array<i64: 32, 32>}, {pipeline_mode = #tpu.pipeline_mode<synchronous>, transform_indices = @transform_6, window_bounds = array<i64: 32, 32>}, {pipeline_mode = #tpu.pipeline_mode<synchronous>, transform_indices = @transform_7, window_bounds = array<i64: 32, 32>}, {transform_indices = @transform_8, window_bounds = array<i64: 8, 32>}, {transform_indices = @transform_9, window_bounds = array<i64: 1, 8, 8>}]} {
    %c0 = arith.constant 0 : index
    %0 = memref.load %arg1[%c0] : memref<2xf32, #tpu.memory_space<smem>>
    %c1 = arith.constant 1 : index
    %1 = memref.load %arg1[%c1] : memref<2xf32, #tpu.memory_space<smem>>
    %c0_0 = arith.constant 0 : index
    %c0_1 = arith.constant 0 : index
    %c0_2 = arith.constant 0 : index
    %2 = vector.load %arg3[%c0_0, %c0_1, %c0_2] : memref<1x8x32xf32, #tpu.memory_space<vmem>>, vector<1x8x32xf32>
    %c0_3 = arith.constant 0 : index
    %c0_4 = arith.constant 0 : index
    %3 = vector.load %arg2[%c0_3, %c0_4] : memref<8x32xf32, #tpu.memory_space<vmem>>, vector<8x32xf32>
    %c0_5 = arith.constant 0 : index
    %c0_6 = arith.constant 0 : index
    %4 = vector.load %arg6[%c0_5, %c0_6] : memref<32x32xf32, #tpu.memory_space<vmem>>, vector<32x32xf32>
    %cst = arith.constant dense<0.000000e+00> : vector<8x32xf32>
    %5 = tpu.matmul %3, %4, %cst {dimension_numbers = #tpu.dot_dimension_numbers<[1], [1], [0], [0], [0, 0, 1, 0], [], []>} : vector<8x32xf32>, vector<32x32xf32>, vector<8x32xf32> -> vector<8x32xf32>
    %6 = vector.shape_cast %5 : vector<8x32xf32> to vector<1x8x32xf32>
    %cst_7 = arith.constant dense<0.000000e+00> : vector<1x8x8xf32>
    %7 = tpu.matmul %6, %2, %cst_7 {dimension_numbers = #tpu.dot_dimension_numbers<[2], [2], [1], [1], [0, 0, 0, 1, 1, 1], [0], [0]>} : vector<1x8x32xf32>, vector<1x8x32xf32>, vector<1x8x8xf32> -> vector<1x8x8xf32>
    %cst_8 = arith.constant dense<0xFF800000> : vector<1x8xf32>
    %8 = vector.multi_reduction <maximumf>, %7, %cst_8 [2] : vector<1x8x8xf32> to vector<1x8xf32>
    %9 = vector.shape_cast %8 : vector<1x8xf32> to vector<1x8x1xf32>
    %10 = vector.broadcast %9 : vector<1x8x1xf32> to vector<1x8x8xf32>
    %11 = arith.subf %7, %10 : vector<1x8x8xf32>
    %12 = math.exp %11 : vector<1x8x8xf32>
    %cst_9 = arith.constant dense<0.000000e+00> : vector<1x8xf32>
    %13 = vector.multi_reduction <add>, %12, %cst_9 [2] : vector<1x8x8xf32> to vector<1x8xf32>
    %14 = vector.shape_cast %13 : vector<1x8xf32> to vector<1x8x1xf32>
    %15 = tpu.reciprocal %14 {approx = true} : vector<1x8x1xf32> -> vector<1x8x1xf32>
    %cst_10 = arith.constant dense<0.000000e+00> : vector<1x8x32xf32>
    %16 = tpu.matmul %12, %2, %cst_10 {dimension_numbers = #tpu.dot_dimension_numbers<[2], [1], [1], [2], [0, 0, 0, 1, 1, 2], [0], [0]>} : vector<1x8x8xf32>, vector<1x8x32xf32>, vector<1x8x32xf32> -> vector<1x8x32xf32>
    %17 = vector.broadcast %15 : vector<1x8x1xf32> to vector<1x8x32xf32>
    %18 = arith.mulf %16, %17 : vector<1x8x32xf32>
    %c0_11 = arith.constant 0 : index
    %c0_12 = arith.constant 0 : index
    %c0_13 = arith.constant 0 : index
    %19 = vector.load %arg4[%c0_11, %c0_12, %c0_13] : memref<1x8x1xf32, #tpu.memory_space<vmem>>, vector<1x8x1xf32>
    %cst_14 = arith.constant 0.000000e+00 : f32
    %20 = arith.subf %cst_14, %1 : f32
    %21 = vector.broadcast %20 : f32 to vector<1x8x1xf32>
    %22 = arith.mulf %19, %21 : vector<1x8x1xf32>
    %23 = math.exp %22 : vector<1x8x1xf32>
    %24 = vector.broadcast %0 : f32 to vector<1x8x1xf32>
    %25 = arith.mulf %24, %23 : vector<1x8x1xf32>
    %26 = vector.broadcast %25 : vector<1x8x1xf32> to vector<1x8x32xf32>
    %27 = arith.mulf %18, %26 : vector<1x8x32xf32>
    %cst_15 = arith.constant 0.000000e+00 : f32
    %28 = vector.broadcast %cst_15 : f32 to vector<1x8x32xf32>
    %29 = arith.maximumf %27, %28 : vector<1x8x32xf32>
    %30 = arith.addf %29, %18 : vector<1x8x32xf32>
    %c0_16 = arith.constant 0 : index
    %c0_17 = arith.constant 0 : index
    %c0_18 = arith.constant 0 : index
    %31 = vector.load %arg5[%c0_16, %c0_17, %c0_18] : memref<1x8x8xf32, #tpu.memory_space<vmem>>, vector<1x8x8xf32>
    %cst_19 = arith.constant dense<0.000000e+00> : vector<1x8x32xf32>
    %32 = tpu.matmul %31, %30, %cst_19 {dimension_numbers = #tpu.dot_dimension_numbers<[2], [1], [1], [2], [0, 0, 0, 1, 1, 2], [0], [0]>} : vector<1x8x8xf32>, vector<1x8x32xf32>, vector<1x8x32xf32> -> vector<1x8x32xf32>
    %33 = vector.shape_cast %32 : vector<1x8x32xf32> to vector<8x32xf32>
    %c0_20 = arith.constant 0 : index
    %c0_21 = arith.constant 0 : index
    %34 = vector.load %arg7[%c0_20, %c0_21] : memref<32x32xf32, #tpu.memory_space<vmem>>, vector<32x32xf32>
    %cst_22 = arith.constant dense<0.000000e+00> : vector<8x32xf32>
    %35 = tpu.matmul %33, %34, %cst_22 {dimension_numbers = #tpu.dot_dimension_numbers<[1], [1], [0], [0], [0, 0, 1, 0], [], []>} : vector<8x32xf32>, vector<32x32xf32>, vector<8x32xf32> -> vector<8x32xf32>
    %c0_23 = arith.constant 0 : index
    %c0_24 = arith.constant 0 : index
    %36 = vector.load %arg8[%c0_23, %c0_24] : memref<32x32xf32, #tpu.memory_space<vmem>>, vector<32x32xf32>
    %cst_25 = arith.constant dense<0.000000e+00> : vector<8x32xf32>
    %37 = tpu.matmul %5, %36, %cst_25 {dimension_numbers = #tpu.dot_dimension_numbers<[1], [1], [0], [0], [0, 0, 1, 0], [], []>} : vector<8x32xf32>, vector<32x32xf32>, vector<8x32xf32> -> vector<8x32xf32>
    %38 = arith.addf %35, %37 : vector<8x32xf32>
    %39 = math.tanh %38 : vector<8x32xf32>
    %c0_26 = arith.constant 0 : index
    %c0_27 = arith.constant 0 : index
    %40 = vector.load %arg9[%c0_26, %c0_27] : memref<8x32xf32, #tpu.memory_space<vmem>>, vector<8x32xf32>
    tpu.vector_store %arg9[%c0_26, %c0_27], %39 {strides = array<i32>} : memref<8x32xf32, #tpu.memory_space<vmem>>, vector<8x32xf32>,
    %41 = vector.broadcast %15 : vector<1x8x1xf32> to vector<1x8x8xf32>
    %42 = arith.mulf %12, %41 : vector<1x8x8xf32>
    %c0_28 = arith.constant 0 : index
    %c0_29 = arith.constant 0 : index
    %c0_30 = arith.constant 0 : index
    %43 = vector.load %arg10[%c0_28, %c0_29, %c0_30] : memref<1x8x8xf32, #tpu.memory_space<vmem>>, vector<1x8x8xf32>
    tpu.vector_store %arg10[%c0_28, %c0_29, %c0_30], %42 {strides = array<i32>} : memref<1x8x8xf32, #tpu.memory_space<vmem>>, vector<1x8x8xf32>,
    return
  }
  func.func @transform_0(%arg0: i32) -> i32 {
    %c0_i32 = arith.constant 0 : i32
    %c0_i32_0 = arith.constant 0 : i32
    return %c0_i32 : i32
  }
  func.func @transform_1(%arg0: i32) -> (i32, i32) {
    %c0_i32 = arith.constant 0 : i32
    %c0_i32_0 = arith.constant 0 : i32
    return %arg0, %c0_i32 : i32, i32
  }
  func.func @transform_2(%arg0: i32) -> (i32, i32, i32) {
    %c0_i32 = arith.constant 0 : i32
    %c0_i32_0 = arith.constant 0 : i32
    %c0_i32_1 = arith.constant 0 : i32
    return %arg0, %c0_i32, %c0_i32_0 : i32, i32, i32
  }
  func.func @transform_3(%arg0: i32) -> (i32, i32, i32) {
    %c0_i32 = arith.constant 0 : i32
    %c0_i32_0 = arith.constant 0 : i32
    %c0_i32_1 = arith.constant 0 : i32
    return %arg0, %c0_i32, %c0_i32_0 : i32, i32, i32
  }
  func.func @transform_4(%arg0: i32) -> (i32, i32, i32) {
    %c0_i32 = arith.constant 0 : i32
    %c0_i32_0 = arith.constant 0 : i32
    %c0_i32_1 = arith.constant 0 : i32
    %c0_i32_2 = arith.constant 0 : i32
    return %c0_i32, %c0_i32_0, %c0_i32_1 : i32, i32, i32
  }
  func.func @transform_5(%arg0: i32) -> (i32, i32) {
    %c0_i32 = arith.constant 0 : i32
    %c0_i32_0 = arith.constant 0 : i32
    %c0_i32_1 = arith.constant 0 : i32
    return %c0_i32, %c0_i32_0 : i32, i32
  }
  func.func @transform_6(%arg0: i32) -> (i32, i32) {
    %c0_i32 = arith.constant 0 : i32
    %c0_i32_0 = arith.constant 0 : i32
    %c0_i32_1 = arith.constant 0 : i32
    return %c0_i32, %c0_i32_0 : i32, i32
  }
  func.func @transform_7(%arg0: i32) -> (i32, i32) {
    %c0_i32 = arith.constant 0 : i32
    %c0_i32_0 = arith.constant 0 : i32
    %c0_i32_1 = arith.constant 0 : i32
    return %c0_i32, %c0_i32_0 : i32, i32
  }
  func.func @transform_8(%arg0: i32) -> (i32, i32) {
    %c0_i32 = arith.constant 0 : i32
    %c0_i32_0 = arith.constant 0 : i32
    return %arg0, %c0_i32 : i32, i32
  }
  func.func @transform_9(%arg0: i32) -> (i32, i32, i32) {
    %c0_i32 = arith.constant 0 : i32
    %c0_i32_0 = arith.constant 0 : i32
    %c0_i32_1 = arith.constant 0 : i32
    return %arg0, %c0_i32, %c0_i32_0 : i32, i32, i32
  }
}

</mosaic_0001>

<llo_original>
// kernel: tpu_custom_call.1
$region0: #{tpu_custom_call.1}
  #allocation0 [shape = 'u32[]', space=smem, size = 0x4, offset = 0x4, fixed_abs, tag = 'smem constant byte address 0x4 - core index']
  #allocation1 [shape = 'u32[144,128]{1,0:T(1,128)}', space=vmem, size = 0x12000, scoped, tag = 'internal scratch']
  %s0 = inlined_call_operand.vmem [shape: f32[2], index: 0, kind: input, shape index: {}]
  %s1 = inlined_call_operand.hbm [shape: f32[16,32], index: 1, kind: input, shape index: {}]
  %s2 = inlined_call_operand.hbm [shape: f32[2,8,32], index: 2, kind: input, shape index: {}]
  %s3 = inlined_call_operand.vmem [shape: f32[2,8,1], index: 3, kind: input, shape index: {}]
  %s4 = inlined_call_operand.hbm [shape: f32[1,8,8], index: 4, kind: input, shape index: {}]
  %s5 = inlined_call_operand.vmem [shape: f32[32,32], index: 5, kind: input, shape index: {}]
  %s6 = inlined_call_operand.hbm [shape: f32[32,32], index: 6, kind: input, shape index: {}]
  %s7 = inlined_call_operand.hbm [shape: f32[32,32], index: 7, kind: input, shape index: {}]
  %s8 = inlined_call_operand.hbm [shape: f32[16,32], index: 8, kind: output, shape index: {0}]
  %s9 = inlined_call_operand.hbm [shape: f32[2,8,8], index: 9, kind: output, shape index: {1}]
  %10 = xla_tuple %s8, %s9
  %s11 = sld [smem:[#allocation0]]
  $region97: #{tpu_custom_call.1} parent=0
    _
  %s13 = ssub.s32 1, %s11
  %s14 = scalar_select 0, %s13, %s11
  $region1: #{tpu_custom_call.1} parent=0
    #allocation2 [shape = 'u8[512]{0}', space=smem, size = 0x200, scoped, tag = 'input window, operand 0, single buffered']
    #allocation3 [shape = 's32[2]{0}', space=sflag, size = 0x8, scoped, tag = 'scoped memory for tpu_custom_call.1']
    #allocation4 [shape = 's32[2]{0}', space=sflag, size = 0x8, scoped, tag = 'scoped memory for tpu_custom_call.1']
    #allocation5 [shape = 's32[2]{0}', space=sflag, size = 0x8, scoped, tag = 'scoped memory for tpu_custom_call.1']
    #allocation6 [shape = 'u8[8192]{0}', space=vmem, size = 0x2000, scoped, tag = 'input window, operand 1']
    #allocation7 [shape = 'u8[8192]{0}', space=vmem, size = 0x2000, scoped, tag = 'input window, operand 2']
    #allocation8 [shape = 's32[2]{0}', space=sflag, size = 0x8, scoped, tag = 'scoped memory for tpu_custom_call.1']
    #allocation9 [shape = 'u8[4096]{0}', space=vmem, size = 0x1000, scoped, tag = 'input window, operand 4, single buffered']
    #allocation10 [shape = 'u8[16384]{0}', space=vmem, size = 0x4000, scoped, tag = 'input window, operand 6, single buffered']
    #allocation11 [shape = 's32[1]{0}', space=sflag, size = 0x4, scoped, tag = 'scoped memory for tpu_custom_call.1']
    #allocation12 [shape = 'u8[16384]{0}', space=vmem, size = 0x4000, scoped, tag = 'input window, operand 7, single buffered']
    #allocation13 [shape = 'u8[8192]{0}', space=vmem, size = 0x2000, scoped, tag = 'output window, operand 0']
    #allocation14 [shape = 'u8[8192]{0}', space=vmem, size = 0x2000, scoped, tag = 'output window, operand 1']
    #allocation15 [shape = 's32[2]{0}', space=sflag, size = 0x8, scoped, tag = 'scoped memory for tpu_custom_call.1']
    %15 = vsyncpa [#allocation5], 0
    %16 = vsyncpa [#allocation3], 0
    %s17 = scalar_lea.sflag [#allocation3], 1
    %18 = vsyncpa %s17, 0
    %19 = vsyncpa [#allocation8], 0
    %s20 = scalar_lea.sflag [#allocation8], 1
    %21 = vsyncpa %s20, 0
    %22 = vsyncpa [#allocation11], 0
    %23 = vsyncpa [#allocation4], 0
    %s24 = scalar_lea.sflag [#allocation4], 1
    %25 = vsyncpa %s24, 0
    %26 = vsyncpa [#allocation15], 0
    %s27 = scalar_lea.sflag [#allocation15], 1
    %28 = vsyncpa %s27, 0
    loop: start=0, step=1, limit=4
    $region2: #{tpu_custom_call.1} parent=1 // loop_pre_header
      _
    $region3: #{tpu_custom_call.1} parent=1 // loop_header
      %s30 = sphi 0, %s34
      %p31 = scmp.ge.s32.totalorder %s30, 4
      %s38 = sphi 0, %s38
      %s40 = sphi 0, %s38
      %s41 = sphi 0, %s40
      %s55 = sphi 0, %s41
      %s61 = sphi 0, %s63
      %s64 = sphi 0, %s61
      %s65 = sphi 0, %s64
      %s81 = sphi 0, %s65
      %s87 = sphi 0, %s89
      %s90 = sphi 0, %s87
      %s91 = sphi 0, %s90
      %s107 = sphi 0, %s91
      %s113 = sphi 0, %s115
      %s116 = sphi 0, %s113
      %s117 = sphi 0, %s116
      %s133 = sphi 0, %s117
      %s137 = sphi 0, %s137
      %s139 = sphi 0, %s137
      %s140 = sphi 0, %s139
      %s154 = sphi 0, %s140
      %s158 = sphi 0, %s158
      %s160 = sphi 0, %s158
      %s161 = sphi 0, %s160
      %s175 = sphi 0, %s161
      %s179 = sphi 0, %s179
      %s181 = sphi 0, %s179
      %s182 = sphi 0, %s181
      %s196 = sphi 0, %s182
      %s200 = sphi 0, %s200
      %s202 = sphi 0, %s200
      %s203 = sphi 0, %s202
      %s217 = sphi 0, %s203
      %s223 = sphi 0, %s225
      %s226 = sphi 0, %s223
      %s227 = sphi 0, %s226
      %s243 = sphi 0, %s227
      %s249 = sphi 0, %s251
      %s252 = sphi 0, %s249
      %s253 = sphi 0, %s252
      %s269 = sphi 0, %s253
    $region4: #{tpu_custom_call.1} parent=1 // loop_header_branch
      %33 = sbr.rel (%p31) target = $region8
    $region5: #{tpu_custom_call.1} parent=1 // loop_body
      %s35 = ssub.s32 %s30, 1
      %s36 = ssub.s32 %s30, 2
      %s37 = sadd.s32 %s30, 1
      %s39 = sadd.s32 %s38, 1
      %p42 = scmp.eq.s32.totalorder %s30, 1
      %p43 = scmp.ne.s32.totalorder %s38, %s40
      %p44 = scmp.eq.s32.totalorder %s30, 0
      %p45 = por %p43, %p44
      %p46 = scmp.ne.s32.totalorder %s38, %s40
      %p47 = scmp.eq.s32.totalorder %s35, 1
      %p48 = por %p46, %p47
      %p49 = scmp.ne.s32.totalorder %s40, %s41
      %p50 = scmp.eq.s32.totalorder %s35, 0
      %p51 = por %p49, %p50
      %p52 = scmp.ne.s32.totalorder %s40, %s41
      %p53 = scmp.eq.s32.totalorder %s36, 1
      %p54 = por %p52, %p53
      %p56 = scmp.ne.s32.totalorder %s41, %s55
      %p57 = scmp.eq.s32.totalorder %s36, 0
      %p58 = por %p56, %p57
      %s59 = ssub.s32 %s30, %s37
      %p60 = scmp.eq.s32.totalorder %s59, 0
      %s62 = sadd.s32 %s61, 1
      %s63 = scalar_select %p60, %s61, %s62
      %p66 = pneg %p60
      %p67 = scmp.eq.s32.totalorder %s30, 1
      %p68 = por %p66, %p67
      %p69 = scmp.ne.s32.totalorder %s61, %s64
      %p70 = scmp.eq.s32.totalorder %s30, 0
      %p71 = por %p69, %p70
      %p72 = scmp.ne.s32.totalorder %s61, %s64
      %p73 = scmp.eq.s32.totalorder %s35, 1
      %p74 = por %p72, %p73
      %p75 = scmp.ne.s32.totalorder %s64, %s65
      %p76 = scmp.eq.s32.totalorder %s35, 0
      %p77 = por %p75, %p76
      %p78 = scmp.ne.s32.totalorder %s64, %s65
      %p79 = scmp.eq.s32.totalorder %s36, 1
      %p80 = por %p78, %p79
      %p82 = scmp.ne.s32.totalorder %s65, %s81
      %p83 = scmp.eq.s32.totalorder %s36, 0
      %p84 = por %p82, %p83
      %s85 = ssub.s32 %s30, %s37
      %p86 = scmp.eq.s32.totalorder %s85, 0
      %s88 = sadd.s32 %s87, 1
      %s89 = scalar_select %p86, %s87, %s88
      %p92 = pneg %p86
      %p93 = scmp.eq.s32.totalorder %s30, 1
      %p94 = por %p92, %p93
      %p95 = scmp.ne.s32.totalorder %s87, %s90
      %p96 = scmp.eq.s32.totalorder %s30, 0
      %p97 = por %p95, %p96
      %p98 = scmp.ne.s32.totalorder %s87, %s90
      %p99 = scmp.eq.s32.totalorder %s35, 1
      %p100 = por %p98, %p99
      %p101 = scmp.ne.s32.totalorder %s90, %s91
      %p102 = scmp.eq.s32.totalorder %s35, 0
      %p103 = por %p101, %p102
      %p104 = scmp.ne.s32.totalorder %s90, %s91
      %p105 = scmp.eq.s32.totalorder %s36, 1
      %p106 = por %p104, %p105
      %p108 = scmp.ne.s32.totalorder %s91, %s107
      %p109 = scmp.eq.s32.totalorder %s36, 0
      %p110 = por %p108, %p109
      %s111 = ssub.s32 %s30, %s37
      %p112 = scmp.eq.s32.totalorder %s111, 0
      %s114 = sadd.s32 %s113, 1
      %s115 = scalar_select %p112, %s113, %s114
      %p118 = pneg %p112
      %p119 = scmp.eq.s32.totalorder %s30, 1
      %p120 = por %p118, %p119
      %p121 = scmp.ne.s32.totalorder %s113, %s116
      %p122 = scmp.eq.s32.totalorder %s30, 0
      %p123 = por %p121, %p122
      %p124 = scmp.ne.s32.totalorder %s113, %s116
      %p125 = scmp.eq.s32.totalorder %s35, 1
      %p126 = por %p124, %p125
      %p127 = scmp.ne.s32.totalorder %s116, %s117
      %p128 = scmp.eq.s32.totalorder %s35, 0
      %p129 = por %p127, %p128
      %p130 = scmp.ne.s32.totalorder %s116, %s117
      %p131 = scmp.eq.s32.totalorder %s36, 1
      %p132 = por %p130, %p131
      %p134 = scmp.ne.s32.totalorder %s117, %s133
      %p135 = scmp.eq.s32.totalorder %s36, 0
      %p136 = por %p134, %p135
      %s138 = sadd.s32 %s137, 1
      %p141 = scmp.eq.s32.totalorder %s30, 1
      %p142 = scmp.ne.s32.totalorder %s137, %s139
      %p143 = scmp.eq.s32.totalorder %s30, 0
      %p144 = por %p142, %p143
      %p145 = scmp.ne.s32.totalorder %s137, %s139
      %p146 = scmp.eq.s32.totalorder %s35, 1
      %p147 = por %p145, %p146
      %p148 = scmp.ne.s32.totalorder %s139, %s140
      %p149 = scmp.eq.s32.totalorder %s35, 0
      %p150 = por %p148, %p149
      %p151 = scmp.ne.s32.totalorder %s139, %s140
      %p152 = scmp.eq.s32.totalorder %s36, 1
      %p153 = por %p151, %p152
      %p155 = scmp.ne.s32.totalorder %s140, %s154
      %p156 = scmp.eq.s32.totalorder %s36, 0
      %p157 = por %p155, %p156
      %s159 = sadd.s32 %s158, 1
      %p162 = scmp.eq.s32.totalorder %s30, 1
      %p163 = scmp.ne.s32.totalorder %s158, %s160
      %p164 = scmp.eq.s32.totalorder %s30, 0
      %p165 = por %p163, %p164
      %p166 = scmp.ne.s32.totalorder %s158, %s160
      %p167 = scmp.eq.s32.totalorder %s35, 1
      %p168 = por %p166, %p167
      %p169 = scmp.ne.s32.totalorder %s160, %s161
      %p170 = scmp.eq.s32.totalorder %s35, 0
      %p171 = por %p169, %p170
      %p172 = scmp.ne.s32.totalorder %s160, %s161
      %p173 = scmp.eq.s32.totalorder %s36, 1
      %p174 = por %p172, %p173
      %p176 = scmp.ne.s32.totalorder %s161, %s175
      %p177 = scmp.eq.s32.totalorder %s36, 0
      %p178 = por %p176, %p177
      %s180 = sadd.s32 %s179, 1
      %p183 = scmp.eq.s32.totalorder %s30, 1
      %p184 = scmp.ne.s32.totalorder %s179, %s181
      %p185 = scmp.eq.s32.totalorder %s30, 0
      %p186 = por %p184, %p185
      %p187 = scmp.ne.s32.totalorder %s179, %s181
      %p188 = scmp.eq.s32.totalorder %s35, 1
      %p189 = por %p187, %p188
      %p190 = scmp.ne.s32.totalorder %s181, %s182
      %p191 = scmp.eq.s32.totalorder %s35, 0
      %p192 = por %p190, %p191
      %p193 = scmp.ne.s32.totalorder %s181, %s182
      %p194 = scmp.eq.s32.totalorder %s36, 1
      %p195 = por %p193, %p194
      %p197 = scmp.ne.s32.totalorder %s182, %s196
      %p198 = scmp.eq.s32.totalorder %s36, 0
      %p199 = por %p197, %p198
      %s201 = sadd.s32 %s200, 1
      %p204 = scmp.eq.s32.totalorder %s30, 1
      %p205 = scmp.ne.s32.totalorder %s200, %s202
      %p206 = scmp.eq.s32.totalorder %s30, 0
      %p207 = por %p205, %p206
      %p208 = scmp.ne.s32.totalorder %s200, %s202
      %p209 = scmp.eq.s32.totalorder %s35, 1
      %p210 = por %p208, %p209
      %p211 = scmp.ne.s32.totalorder %s202, %s203
      %p212 = scmp.eq.s32.totalorder %s35, 0
      %p213 = por %p211, %p212
      %p214 = scmp.ne.s32.totalorder %s202, %s203
      %p215 = scmp.eq.s32.totalorder %s36, 1
      %p216 = por %p214, %p215
      %p218 = scmp.ne.s32.totalorder %s203, %s217
      %p219 = scmp.eq.s32.totalorder %s36, 0
      %p220 = por %p218, %p219
      %s221 = ssub.s32 %s30, %s37
      %p222 = scmp.eq.s32.totalorder %s221, 0
      %s224 = sadd.s32 %s223, 1
      %s225 = scalar_select %p222, %s223, %s224
      %p228 = pneg %p222
      %p229 = scmp.eq.s32.totalorder %s30, 1
      %p230 = por %p228, %p229
      %p231 = scmp.ne.s32.totalorder %s223, %s226
      %p232 = scmp.eq.s32.totalorder %s30, 0
      %p233 = por %p231, %p232
      %p234 = scmp.ne.s32.totalorder %s223, %s226
      %p235 = scmp.eq.s32.totalorder %s35, 1
      %p236 = por %p234, %p235
      %p237 = scmp.ne.s32.totalorder %s226, %s227
      %p238 = scmp.eq.s32.totalorder %s35, 0
      %p239 = por %p237, %p238
      %p240 = scmp.ne.s32.totalorder %s226, %s227
      %p241 = scmp.eq.s32.totalorder %s36, 1
      %p242 = por %p240, %p241
      %p244 = scmp.ne.s32.totalorder %s227, %s243
      %p245 = scmp.eq.s32.totalorder %s36, 0
      %p246 = por %p244, %p245
      %s247 = ssub.s32 %s30, %s37
      %p248 = scmp.eq.s32.totalorder %s247, 0
      %s250 = sadd.s32 %s249, 1
      %s251 = scalar_select %p248, %s249, %s250
      %p254 = pneg %p248
      %p255 = scmp.eq.s32.totalorder %s30, 1
      %p256 = por %p254, %p255
      %p257 = scmp.ne.s32.totalorder %s249, %s252
      %p258 = scmp.eq.s32.totalorder %s30, 0
      %p259 = por %p257, %p258
      %p260 = scmp.ne.s32.totalorder %s249, %s252
      %p261 = scmp.eq.s32.totalorder %s35, 1
      %p262 = por %p260, %p261
      %p263 = scmp.ne.s32.totalorder %s252, %s253
      %p264 = scmp.eq.s32.totalorder %s35, 0
      %p265 = por %p263, %p264
      %p266 = scmp.ne.s32.totalorder %s252, %s253
      %p267 = scmp.eq.s32.totalorder %s36, 1
      %p268 = por %p266, %p267
      %p270 = scmp.ne.s32.totalorder %s253, %s269
      %p271 = scmp.eq.s32.totalorder %s36, 0
      %p272 = por %p270, %p271
      %p273 = scmp.le.s32.totalorder 1, %s30
      %p274 = scmp.lt.s32.totalorder %s30, 3
      %p275 = pnand %p273, %p274
      %p276 = pneg %p275
      // Predicated region
      $region9: #{tpu_custom_call.1} parent=5 // pred_check
        _
      $region10: #{tpu_custom_call.1} parent=5 // pred_check_branch
        %278 = sbr.rel (%p275) target = $region12
      $region11: #{tpu_custom_call.1} parent=5 // pred_region
        %s279 = ssub.s32 %s30, 1
        // Predicated region
        $region13: #{tpu_custom_call.1} parent=11 // pred_check
          %p280 = pneg %p51
        $region14: #{tpu_custom_call.1} parent=11 // pred_check_branch
          %282 = sbr.rel (%p280) target = $region16
        $region15: #{tpu_custom_call.1} parent=11 // pred_region
          %s284 = ssub.s32 16, 16
          %285 = vsyncadd [#allocation5], %s284
          %s287 = sshll.u32 %s0, 4
          %s288 = int_to_ptr.vmem [resolvable:$true] %s287
          %290 = dma.vmem_to_smem %s288, 16, [#allocation2], [#allocation5]
        $region16: #{tpu_custom_call.1} parent=11 // pred_fallthru
          _
        // Predicated region
        $region17: #{tpu_custom_call.1} parent=11 // pred_check
          %p291 = pneg %p150
        $region18: #{tpu_custom_call.1} parent=11 // pred_check_branch
          %293 = sbr.rel (%p291) target = $region20
        $region19: #{tpu_custom_call.1} parent=11 // pred_region
          %s295 = ssub.s32 128, 128
          %296 = vsyncadd [#allocation8], %s295
          %s298 = sshll.u32 [#allocation9], 4
          %s299 = int_to_ptr.vmem [resolvable:$true] %s298
          %301 = dma.hbm_to_vmem [thread:$0]  %s4, 128, %s299, [#allocation8]
        $region20: #{tpu_custom_call.1} parent=11 // pred_fallthru
          _
        // Predicated region
        $region21: #{tpu_custom_call.1} parent=11 // pred_check
          %p302 = pneg %p171
        $region22: #{tpu_custom_call.1} parent=11 // pred_check_branch
          %304 = sbr.rel (%p302) target = $region24
        $region23: #{tpu_custom_call.1} parent=11 // pred_region
          _
        $region24: #{tpu_custom_call.1} parent=11 // pred_fallthru
          _
        // Predicated region
        $region25: #{tpu_custom_call.1} parent=11 // pred_check
          %p305 = pneg %p192
        $region26: #{tpu_custom_call.1} parent=11 // pred_check_branch
          %307 = sbr.rel (%p305) target = $region28
        $region27: #{tpu_custom_call.1} parent=11 // pred_region
          %s309 = ssub.s32 512, 512
          %310 = vsyncadd [#allocation11], %s309
          %s311 = sshll.u32 [#allocation10], 4
          %s312 = int_to_ptr.vmem [resolvable:$true] %s311
          %317 = dma.hbm_to_vmem [thread:$0]  %s6, 512, %s312, [#allocation11], 128, 128, 8
        $region28: #{tpu_custom_call.1} parent=11 // pred_fallthru
          _
        // Predicated region
        $region29: #{tpu_custom_call.1} parent=11 // pred_check
          %p318 = pneg %p213
        $region30: #{tpu_custom_call.1} parent=11 // pred_check_branch
          %320 = sbr.rel (%p318) target = $region32
        $region31: #{tpu_custom_call.1} parent=11 // pred_region
          %s322 = ssub.s32 512, 512
          %323 = vsyncadd [#allocation11], %s322
          %s324 = sshll.u32 [#allocation12], 4
          %s325 = int_to_ptr.vmem [resolvable:$true] %s324
          %330 = dma.hbm_to_vmem [thread:$0]  %s7, 512, %s325, [#allocation11], 128, 128, 8
        $region32: #{tpu_custom_call.1} parent=11 // pred_fallthru
          _
      $region12: #{tpu_custom_call.1} parent=5 // pred_fallthru
        _
      %p331 = scmp.lt.s32.totalorder %s30, 2
      // Predicated region
      $region33: #{tpu_custom_call.1} parent=5 // pred_check
        %p332 = pneg %p331
      $region34: #{tpu_custom_call.1} parent=5 // pred_check_branch
        %334 = sbr.rel (%p332) target = $region36
      $region35: #{tpu_custom_call.1} parent=5 // pred_region
        // Predicated region
        $region37: #{tpu_custom_call.1} parent=35 // pred_check
          %p335 = pneg %p71
        $region38: #{tpu_custom_call.1} parent=35 // pred_check_branch
          %337 = sbr.rel (%p335) target = $region40
        $region39: #{tpu_custom_call.1} parent=35 // pred_region
          %s338 = sand.u32 %s61, 1
          %s339 = scalar_lea.sflag [#allocation3], %s338
          %s340 = sand.u32 %s61, 1
          %s341 = smul.addr %s340, 8
          %s342 = scalar_lea.vmem [#allocation6], %s341
          %s344 = ssub.s32 128, 128
          %345 = vsyncadd %s339, %s344
          %s346 = smul.addr %s30, 128
          %s347 = scalar_lea.hbm %s1, %s346
          %s349 = sshll.u32 %s342, 4
          %s350 = int_to_ptr.vmem [resolvable:$true] %s349
          %352 = dma.hbm_to_vmem [thread:$0]  %s347, 128, %s350, %s339
        $region40: #{tpu_custom_call.1} parent=35 // pred_fallthru
          _
        // Predicated region
        $region41: #{tpu_custom_call.1} parent=35 // pred_check
          %p353 = pneg %p97
        $region42: #{tpu_custom_call.1} parent=35 // pred_check_branch
          %355 = sbr.rel (%p353) target = $region44
        $region43: #{tpu_custom_call.1} parent=35 // pred_region
          %s356 = sand.u32 %s30, 1
          %s357 = scalar_lea.sflag [#allocation8], %s356
          %s358 = sand.u32 %s87, 1
          %s359 = smul.addr %s358, 8
          %s360 = scalar_lea.vmem [#allocation7], %s359
          %s362 = ssub.s32 128, 128
          %363 = vsyncadd %s357, %s362
          %s364 = smul.addr %s30, 128
          %s365 = scalar_lea.hbm %s2, %s364
          %s367 = sshll.u32 %s360, 4
          %s368 = int_to_ptr.vmem [resolvable:$true] %s367
          %370 = dma.hbm_to_vmem [thread:$0]  %s365, 128, %s368, %s357
        $region44: #{tpu_custom_call.1} parent=35 // pred_fallthru
          _
        // Predicated region
        $region45: #{tpu_custom_call.1} parent=35 // pred_check
          %p371 = pneg %p123
        $region46: #{tpu_custom_call.1} parent=35 // pred_check_branch
          %373 = sbr.rel (%p371) target = $region48
        $region47: #{tpu_custom_call.1} parent=35 // pred_region
          %p374 = scmp.lt.s32.totalorder %s30, 1
          %s375 = scalar_select %p374, %s30, 1
          %s376 = smul.addr %s375, 8
          %s377 = scalar_lea.vmem %s3, %s376
        $region48: #{tpu_custom_call.1} parent=35 // pred_fallthru
          _
      $region36: #{tpu_custom_call.1} parent=5 // pred_fallthru
        _
      %p378 = scmp.le.s32.totalorder 1, %s30
      %p379 = scmp.lt.s32.totalorder %s30, 3
      %p380 = pnand %p378, %p379
      %p381 = pneg %p380
      // Predicated region
      $region49: #{tpu_custom_call.1} parent=5 // pred_check
        _
      $region50: #{tpu_custom_call.1} parent=5 // pred_check_branch
        %383 = sbr.rel (%p380) target = $region52
      $region51: #{tpu_custom_call.1} parent=5 // pred_region
        %s384 = ssub.s32 %s30, 1
        // Predicated region
        $region53: #{tpu_custom_call.1} parent=51 // pred_check
          %p385 = pneg %p51
        $region54: #{tpu_custom_call.1} parent=51 // pred_check_branch
          %387 = sbr.rel (%p385) target = $region56
        $region55: #{tpu_custom_call.1} parent=51 // pred_region
          %388 = dma.done [#allocation5], 16
        $region56: #{tpu_custom_call.1} parent=51 // pred_fallthru
          _
        %s389 = sand.u32 %s64, 1
        %s390 = scalar_lea.sflag [#allocation3], %s389
        %s391 = sand.u32 %s64, 1
        %s392 = smul.addr %s391, 8
        %s393 = scalar_lea.vmem [#allocation6], %s392
        // Predicated region
        $region57: #{tpu_custom_call.1} parent=51 // pred_check
          %p394 = pneg %p77
        $region58: #{tpu_custom_call.1} parent=51 // pred_check_branch
          %396 = sbr.rel (%p394) target = $region60
        $region59: #{tpu_custom_call.1} parent=51 // pred_region
          %397 = dma.done %s390, 128
        $region60: #{tpu_custom_call.1} parent=51 // pred_fallthru
          _
        %s398 = sand.u32 %s35, 1
        %s399 = scalar_lea.sflag [#allocation8], %s398
        %s400 = sand.u32 %s90, 1
        %s401 = smul.addr %s400, 8
        %s402 = scalar_lea.vmem [#allocation7], %s401
        // Predicated region
        $region61: #{tpu_custom_call.1} parent=51 // pred_check
          %p403 = pneg %p103
        $region62: #{tpu_custom_call.1} parent=51 // pred_check_branch
          %405 = sbr.rel (%p403) target = $region64
        $region63: #{tpu_custom_call.1} parent=51 // pred_region
          %406 = dma.done %s399, 128
        $region64: #{tpu_custom_call.1} parent=51 // pred_fallthru
          _
        // Predicated region
        $region65: #{tpu_custom_call.1} parent=51 // pred_check
          %p407 = pneg %p150
        $region66: #{tpu_custom_call.1} parent=51 // pred_check_branch
          %409 = sbr.rel (%p407) target = $region68
        $region67: #{tpu_custom_call.1} parent=51 // pred_region
          %410 = dma.done [#allocation8], 128
        $region68: #{tpu_custom_call.1} parent=51 // pred_fallthru
          _
        // Predicated region
        $region69: #{tpu_custom_call.1} parent=51 // pred_check
          %p411 = pneg %p192
        $region70: #{tpu_custom_call.1} parent=51 // pred_check_branch
          %413 = sbr.rel (%p411) target = $region72
        $region71: #{tpu_custom_call.1} parent=51 // pred_region
          %414 = dma.done [#allocation11], 512
        $region72: #{tpu_custom_call.1} parent=51 // pred_fallthru
          _
        // Predicated region
        $region73: #{tpu_custom_call.1} parent=51 // pred_check
          %p415 = pneg %p213
        $region74: #{tpu_custom_call.1} parent=51 // pred_check_branch
          %417 = sbr.rel (%p415) target = $region76
        $region75: #{tpu_custom_call.1} parent=51 // pred_region
          %418 = dma.done [#allocation11], 512
        $region76: #{tpu_custom_call.1} parent=51 // pred_fallthru
          _
        %419 = sfence
        %p420 = pneg %p51
        %p421 = pneg %p48
        %s422 = sand.u32 %s64, 1
        %s423 = scalar_lea.sflag [#allocation3], %s422
        %s424 = sand.u32 %s64, 1
        %s425 = smul.addr %s424, 8
        %s426 = scalar_lea.vmem [#allocation6], %s425
        %p427 = pneg %p77
        %p428 = pneg %p74
        %s429 = sand.u32 %s35, 1
        %s430 = scalar_lea.sflag [#allocation8], %s429
        %s431 = sand.u32 %s90, 1
        %s432 = smul.addr %s431, 8
        %s433 = scalar_lea.vmem [#allocation7], %s432
        %p434 = pneg %p103
        %p435 = pneg %p100
        %p436 = scmp.lt.s32.totalorder %s35, 1
        %s437 = scalar_select %p436, %s35, 1
        %s438 = smul.addr %s437, 8
        %s439 = scalar_lea.vmem %s3, %s438
        %p440 = pneg %p129
        %p441 = pneg %p126
        %p442 = pneg %p150
        %p443 = pneg %p147
        %p444 = pneg %p171
        %p445 = pneg %p168
        %p446 = pneg %p192
        %p447 = pneg %p189
        %p448 = pneg %p213
        %p449 = pneg %p210
        %p450 = pneg %p239
        %p451 = pneg %p236
        %s452 = sand.u32 %s226, 1
        %s453 = scalar_lea.sflag [#allocation4], %s452
        %s454 = sand.u32 %s226, 1
        %s455 = smul.addr %s454, 8
        %s456 = scalar_lea.vmem [#allocation13], %s455
        %p457 = pneg %p265
        %p458 = pneg %p262
        %s459 = sand.u32 %s252, 1
        %s460 = scalar_lea.sflag [#allocation15], %s459
        %s461 = sand.u32 %s252, 1
        %s462 = smul.addr %s461, 8
        %s463 = scalar_lea.vmem [#allocation14], %s462
        %p464 = scmp.lt.s32.totalorder %s35, 1
        %s465 = scalar_select %p464, %s35, 1
        %s466 = smul.addr %s465, 8
        %s467 = scalar_lea.vmem %s3, %s466
        %s468 = sld [smem:[#allocation2]]
        %s469 = sld [smem:[#allocation2 + $0x1]]
        %v470 = vld [vmem:[%s402] sm:$0xff]
        %v471 = vld [vmem:[%s393] sm:$0xff]
        %v472 = vld [vmem:[%s5] sm:$0xff]
        %v473 = vld [vmem:[%s5 + $0x8] sm:$0xff]
        %v474 = vld [vmem:[%s5 + $0x10] sm:$0xff]
        %v475 = vld [vmem:[%s5 + $0x18] sm:$0xff]
        %vm476 = vcmask 261120
        %v478 = vsel %vm476, %v471, 0
        %v481 = vsel %vm476, %v472, 0
        %v484 = vsel %vm476, %v473, 0
        %v487 = vsel %vm476, %v474, 0
        %v490 = vsel %vm476, %v475, 0
        %492 = vmatprep.subr.mxu0 0.0
        %493 = vmatpush1.xpose.msra.mxu0 %v481
        %494 = vmatprep.subr.mxu0 0.0
        %495 = vmatpush1.xpose.msra.mxu0 %v484
        %496 = vmatprep.subr.mxu0 0.0
        %497 = vmatpush1.xpose.msra.mxu0 %v487
        %498 = vmatprep.subr.mxu0 0.0
        %499 = vmatpush1.xpose.msra.mxu0 %v490
        %500 = vmatprep.subr.mxu0 0.0
        %501 = vmatpush1.xpose.msra.mxu0 0.0
        %502 = vmatprep.subr.mxu0 0.0
        %503 = vmatpush1.xpose.msra.mxu0 0.0
        %504 = vmatprep.subr.mxu0 0.0
        %505 = vmatpush1.xpose.msra.mxu0 0.0
        %506 = vmatprep.subr.mxu0 0.0
        %507 = vmatpush1.xpose.msra.mxu0 0.0
        %508 = vmatprep.subr.mxu0 0.0
        %509 = vmatpush1.xpose.msra.mxu0 0.0
        %510 = vmatprep.subr.mxu0 0.0
        %511 = vmatpush1.xpose.msra.mxu0 0.0
        %512 = vmatprep.subr.mxu0 0.0
        %513 = vmatpush1.xpose.msra.mxu0 0.0
        %514 = vmatprep.subr.mxu0 0.0
        %515 = vmatpush1.xpose.msra.mxu0 0.0
        %516 = vmatprep.subr.mxu0 0.0
        %517 = vmatpush1.xpose.msra.mxu0 0.0
        %518 = vmatprep.subr.mxu0 0.0
        %519 = vmatpush1.xpose.msra.mxu0 0.0
        %520 = vmatprep.subr.mxu0 0.0
        %521 = vmatpush1.xpose.msra.mxu0 0.0
        %522 = vmatprep.subr.mxu0 0.0
        %523 = vmatpush1.xpose.msra.mxu0 0.0
        %524 = vmatprep.subr.mxu0 0.0
        %525 = vmatpush1.xpose.msra.mxu0 0.0
        %526 = vmatprep.subr.mxu0 0.0
        %527 = vmatpush1.xpose.msra.mxu0 0.0
        %528 = vmatprep.subr.mxu0 0.0
        %529 = vmatpush1.xpose.msra.mxu0 0.0
        %530 = vmatprep.subr.mxu0 0.0
        %531 = vmatpush1.xpose.msra.mxu0 0.0
        %532 = vmatprep.subr.mxu0 0.0
        %533 = vmatpush1.xpose.msra.mxu0 0.0
        %534 = vmatprep.subr.mxu0 0.0
        %535 = vmatpush1.xpose.msra.mxu0 0.0
        %536 = vmatprep.subr.mxu0 0.0
        %537 = vmatpush1.xpose.msra.mxu0 0.0
        %538 = vmatprep.subr.mxu0 0.0
        %539 = vmatpush1.xpose.msra.mxu0 0.0
        %540 = vmatprep.subr.mxu0 0.0
        %541 = vmatpush1.xpose.msra.mxu0 0.0
        %542 = vmatprep.subr.mxu0 0.0
        %543 = vmatpush1.xpose.msra.mxu0 0.0
        %544 = vmatprep.subr.mxu0 0.0
        %545 = vmatpush1.xpose.msra.mxu0 0.0
        %546 = vmatprep.subr.mxu0 0.0
        %547 = vmatpush1.xpose.msra.mxu0 0.0
        %548 = vmatprep.subr.mxu0 0.0
        %549 = vmatpush1.xpose.msra.mxu0 0.0
        %550 = vmatprep.subr.mxu0 0.0
        %551 = vmatpush1.xpose.msra.mxu0 0.0
        %552 = vmatprep.subr.mxu0 0.0
        %553 = vmatpush1.xpose.msra.mxu0 0.0
        %554 = vmatprep.subr.mxu0 0.0
        %555 = vmatpush1.xpose.msra.mxu0 0.0
        %556 = vmatprep.mubr.f32.mxu0 0.0
        %557 = vmatmul.mubr.f32.gmra.mrb[0].mxu0 %v478
        %v558 = vpop.f32.mrb[0].mxu0
        %v559 = vadd.f32 0.0, %v558
        %v560 = vpop.f32.mrb[0].mxu0
        %561 = vdwg.mxu0
        %v563 = vsel %vm476, %v559, 0
        %v566 = vsel %vm476, %v470, 0
        %568 = vmatprep.subr.mxu0 0.0
        %569 = vmatpush1.xpose.msra.mxu0 %v566
        %570 = vmatprep.subr.mxu0 0.0
        %571 = vmatpush1.xpose.msra.mxu0 0.0
        %572 = vmatprep.subr.mxu0 0.0
        %573 = vmatpush1.xpose.msra.mxu0 0.0
        %574 = vmatprep.subr.mxu0 0.0
        %575 = vmatpush1.xpose.msra.mxu0 0.0
        %576 = vmatprep.subr.mxu0 0.0
        %577 = vmatpush1.xpose.msra.mxu0 0.0
        %578 = vmatprep.subr.mxu0 0.0
        %579 = vmatpush1.xpose.msra.mxu0 0.0
        %580 = vmatprep.subr.mxu0 0.0
        %581 = vmatpush1.xpose.msra.mxu0 0.0
        %582 = vmatprep.subr.mxu0 0.0
        %583 = vmatpush1.xpose.msra.mxu0 0.0
        %584 = vmatprep.subr.mxu0 0.0
        %585 = vmatpush1.xpose.msra.mxu0 0.0
        %586 = vmatprep.subr.mxu0 0.0
        %587 = vmatpush1.xpose.msra.mxu0 0.0
        %588 = vmatprep.subr.mxu0 0.0
        %589 = vmatpush1.xpose.msra.mxu0 0.0
        %590 = vmatprep.subr.mxu0 0.0
        %591 = vmatpush1.xpose.msra.mxu0 0.0
        %592 = vmatprep.subr.mxu0 0.0
        %593 = vmatpush1.xpose.msra.mxu0 0.0
        %594 = vmatprep.subr.mxu0 0.0
        %595 = vmatpush1.xpose.msra.mxu0 0.0
        %596 = vmatprep.subr.mxu0 0.0
        %597 = vmatpush1.xpose.msra.mxu0 0.0
        %598 = vmatprep.subr.mxu0 0.0
        %599 = vmatpush1.xpose.msra.mxu0 0.0
        %600 = vmatprep.subr.mxu0 0.0
        %601 = vmatpush1.xpose.msra.mxu0 0.0
        %602 = vmatprep.subr.mxu0 0.0
        %603 = vmatpush1.xpose.msra.mxu0 0.0
        %604 = vmatprep.subr.mxu0 0.0
        %605 = vmatpush1.xpose.msra.mxu0 0.0
        %606 = vmatprep.subr.mxu0 0.0
        %607 = vmatpush1.xpose.msra.mxu0 0.0
        %608 = vmatprep.subr.mxu0 0.0
        %609 = vmatpush1.xpose.msra.mxu0 0.0
        %610 = vmatprep.subr.mxu0 0.0
        %611 = vmatpush1.xpose.msra.mxu0 0.0
        %612 = vmatprep.subr.mxu0 0.0
        %613 = vmatpush1.xpose.msra.mxu0 0.0
        %614 = vmatprep.subr.mxu0 0.0
        %615 = vmatpush1.xpose.msra.mxu0 0.0
        %616 = vmatprep.subr.mxu0 0.0
        %617 = vmatpush1.xpose.msra.mxu0 0.0
        %618 = vmatprep.subr.mxu0 0.0
        %619 = vmatpush1.xpose.msra.mxu0 0.0
        %620 = vmatprep.subr.mxu0 0.0
        %621 = vmatpush1.xpose.msra.mxu0 0.0
        %622 = vmatprep.subr.mxu0 0.0
        %623 = vmatpush1.xpose.msra.mxu0 0.0
        %624 = vmatprep.subr.mxu0 0.0
        %625 = vmatpush1.xpose.msra.mxu0 0.0
        %626 = vmatprep.subr.mxu0 0.0
        %627 = vmatpush1.xpose.msra.mxu0 0.0
        %628 = vmatprep.subr.mxu0 0.0
        %629 = vmatpush1.xpose.msra.mxu0 0.0
        %630 = vmatprep.subr.mxu0 0.0
        %631 = vmatpush1.xpose.msra.mxu0 0.0
        %632 = vmatprep.mubr.f32.mxu0 0.0
        %633 = vmatmul.mubr.f32.gmra.mrb[0].mxu0 %v563
        %v634 = vpop.f32.mrb[0].mxu0
        %v635 = vadd.f32 0.0, %v634
        %v636 = vpop.f32.mrb[0].mxu0
        %637 = vdwg.mxu0
        %vm638 = vcmask 64512
        %v639 = vsel %vm638, %v635, -inf
        %640 = vmax.xlane.f32.xlu0 %v639
        %v641 = vpop.xlane.xlu0 %640
        %v642 = vsub.f32 %v635, %v641
        %v643 = vmul.f32 %v642, 1.442695
        %v644 = vpow.pop %v643
        %v645 = vsel %vm638, %v644, 0.0
        %646 = vadd.xlane.f32.xlu0 %v645
        %v647 = vpop.xlane.xlu0 %646
        %v648 = vrcp.pop %v647
        %v650 = vsel %vm638, %v644, 0
        %652 = vmatprep.subr.mxu0 0.0
        %653 = vmatpush1.msra.mxu0 %v470
        %654 = vmatprep.subr.mxu0 0.0
        %655 = vmatpush1.msra.mxu0 0.0
        %656 = vmatprep.subr.mxu0 0.0
        %657 = vmatpush1.msra.mxu0 0.0
        %658 = vmatprep.subr.mxu0 0.0
        %659 = vmatpush1.msra.mxu0 0.0
        %660 = vmatprep.subr.mxu0 0.0
        %661 = vmatpush1.msra.mxu0 0.0
        %662 = vmatprep.subr.mxu0 0.0
        %663 = vmatpush1.msra.mxu0 0.0
        %664 = vmatprep.subr.mxu0 0.0
        %665 = vmatpush1.msra.mxu0 0.0
        %666 = vmatprep.subr.mxu0 0.0
        %667 = vmatpush1.msra.mxu0 0.0
        %668 = vmatprep.subr.mxu0 0.0
        %669 = vmatpush1.msra.mxu0 0.0
        %670 = vmatprep.subr.mxu0 0.0
        %671 = vmatpush1.msra.mxu0 0.0
        %672 = vmatprep.subr.mxu0 0.0
        %673 = vmatpush1.msra.mxu0 0.0
        %674 = vmatprep.subr.mxu0 0.0
        %675 = vmatpush1.msra.mxu0 0.0
        %676 = vmatprep.subr.mxu0 0.0
        %677 = vmatpush1.msra.mxu0 0.0
        %678 = vmatprep.subr.mxu0 0.0
        %679 = vmatpush1.msra.mxu0 0.0
        %680 = vmatprep.subr.mxu0 0.0
        %681 = vmatpush1.msra.mxu0 0.0
        %682 = vmatprep.subr.mxu0 0.0
        %683 = vmatpush1.msra.mxu0 0.0
        %684 = vmatprep.subr.mxu0 0.0
        %685 = vmatpush1.msra.mxu0 0.0
        %686 = vmatprep.subr.mxu0 0.0
        %687 = vmatpush1.msra.mxu0 0.0
        %688 = vmatprep.subr.mxu0 0.0
        %689 = vmatpush1.msra.mxu0 0.0
        %690 = vmatprep.subr.mxu0 0.0
        %691 = vmatpush1.msra.mxu0 0.0
        %692 = vmatprep.subr.mxu0 0.0
        %693 = vmatpush1.msra.mxu0 0.0
        %694 = vmatprep.subr.mxu0 0.0
        %695 = vmatpush1.msra.mxu0 0.0
        %696 = vmatprep.subr.mxu0 0.0
        %697 = vmatpush1.msra.mxu0 0.0
        %698 = vmatprep.subr.mxu0 0.0
        %699 = vmatpush1.msra.mxu0 0.0
        %700 = vmatprep.subr.mxu0 0.0
        %701 = vmatpush1.msra.mxu0 0.0
        %702 = vmatprep.subr.mxu0 0.0
        %703 = vmatpush1.msra.mxu0 0.0
        %704 = vmatprep.subr.mxu0 0.0
        %705 = vmatpush1.msra.mxu0 0.0
        %706 = vmatprep.subr.mxu0 0.0
        %707 = vmatpush1.msra.mxu0 0.0
        %708 = vmatprep.subr.mxu0 0.0
        %709 = vmatpush1.msra.mxu0 0.0
        %710 = vmatprep.subr.mxu0 0.0
        %711 = vmatpush1.msra.mxu0 0.0
        %712 = vmatprep.subr.mxu0 0.0
        %713 = vmatpush1.msra.mxu0 0.0
        %714 = vmatprep.subr.mxu0 0.0
        %715 = vmatpush1.msra.mxu0 0.0
        %716 = vmatprep.mubr.f32.mxu0 0.0
        %717 = vmatmul.mubr.f32.gmra.mrb[0].mxu0 %v650
        %v718 = vpop.f32.mrb[0].mxu0
        %v719 = vadd.f32 0.0, %v718
        %v720 = vpop.f32.mrb[0].mxu0
        %721 = vdwg.mxu0
        %v722 = vmul.f32 %v719, %v648
        %v723 = vld [vmem:[%s467] sm:$0xff]
        %s724 = ssub.f32 0.0, %s469
        %v725 = vstv %s724
        %v726 = vmul.f32 %v723, %v725
        %v727 = vmul.f32 %v726, 1.442695
        %v728 = vpow.pop %v727
        %v729 = vstv %s468
        %v730 = vmul.f32 %v729, %v728
        %732 = vset.pattern.permute.xlu0 0
        %733 = vperm.xlu0 %732, %v730
        %v734 = vpop.permute.xlu0 %733
        %v736 = vmul.f32 %v722, %v734
        %v737 = vmax.f32 %v736, 0.0
        %v738 = vadd.f32 %v737, %v722
        %v739 = vld [vmem:[#allocation9] sm:$0xff]
        %v741 = vsel %vm638, %v739, 0
        %743 = vmatprep.subr.mxu0 0.0
        %744 = vmatpush1.msra.mxu0 %v738
        %745 = vmatprep.subr.mxu0 0.0
        %746 = vmatpush1.msra.mxu0 0.0
        %747 = vmatprep.subr.mxu0 0.0
        %748 = vmatpush1.msra.mxu0 0.0
        %749 = vmatprep.subr.mxu0 0.0
        %750 = vmatpush1.msra.mxu0 0.0
        %751 = vmatprep.subr.mxu0 0.0
        %752 = vmatpush1.msra.mxu0 0.0
        %753 = vmatprep.subr.mxu0 0.0
        %754 = vmatpush1.msra.mxu0 0.0
        %755 = vmatprep.subr.mxu0 0.0
        %756 = vmatpush1.msra.mxu0 0.0
        %757 = vmatprep.subr.mxu0 0.0
        %758 = vmatpush1.msra.mxu0 0.0
        %759 = vmatprep.subr.mxu0 0.0
        %760 = vmatpush1.msra.mxu0 0.0
        %761 = vmatprep.subr.mxu0 0.0
        %762 = vmatpush1.msra.mxu0 0.0
        %763 = vmatprep.subr.mxu0 0.0
        %764 = vmatpush1.msra.mxu0 0.0
        %765 = vmatprep.subr.mxu0 0.0
        %766 = vmatpush1.msra.mxu0 0.0
        %767 = vmatprep.subr.mxu0 0.0
        %768 = vmatpush1.msra.mxu0 0.0
        %769 = vmatprep.subr.mxu0 0.0
        %770 = vmatpush1.msra.mxu0 0.0
        %771 = vmatprep.subr.mxu0 0.0
        %772 = vmatpush1.msra.mxu0 0.0
        %773 = vmatprep.subr.mxu0 0.0
        %774 = vmatpush1.msra.mxu0 0.0
        %775 = vmatprep.subr.mxu0 0.0
        %776 = vmatpush1.msra.mxu0 0.0
        %777 = vmatprep.subr.mxu0 0.0
        %778 = vmatpush1.msra.mxu0 0.0
        %779 = vmatprep.subr.mxu0 0.0
        %780 = vmatpush1.msra.mxu0 0.0
        %781 = vmatprep.subr.mxu0 0.0
        %782 = vmatpush1.msra.mxu0 0.0
        %783 = vmatprep.subr.mxu0 0.0
        %784 = vmatpush1.msra.mxu0 0.0
        %785 = vmatprep.subr.mxu0 0.0
        %786 = vmatpush1.msra.mxu0 0.0
        %787 = vmatprep.subr.mxu0 0.0
        %788 = vmatpush1.msra.mxu0 0.0
        %789 = vmatprep.subr.mxu0 0.0
        %790 = vmatpush1.msra.mxu0 0.0
        %791 = vmatprep.subr.mxu0 0.0
        %792 = vmatpush1.msra.mxu0 0.0
        %793 = vmatprep.subr.mxu0 0.0
        %794 = vmatpush1.msra.mxu0 0.0
        %795 = vmatprep.subr.mxu0 0.0
        %796 = vmatpush1.msra.mxu0 0.0
        %797 = vmatprep.subr.mxu0 0.0
        %798 = vmatpush1.msra.mxu0 0.0
        %799 = vmatprep.subr.mxu0 0.0
        %800 = vmatpush1.msra.mxu0 0.0
        %801 = vmatprep.subr.mxu0 0.0
        %802 = vmatpush1.msra.mxu0 0.0
        %803 = vmatprep.subr.mxu0 0.0
        %804 = vmatpush1.msra.mxu0 0.0
        %805 = vmatprep.subr.mxu0 0.0
        %806 = vmatpush1.msra.mxu0 0.0
        %807 = vmatprep.mubr.f32.mxu0 0.0
        %808 = vmatmul.mubr.f32.gmra.mrb[0].mxu0 %v741
        %v809 = vpop.f32.mrb[0].mxu0
        %v810 = vadd.f32 0.0, %v809
        %v811 = vpop.f32.mrb[0].mxu0
        %812 = vdwg.mxu0
        %v813 = vld [vmem:[#allocation10] sm:$0xff]
        %v814 = vld [vmem:[#allocation10 + $0x8] sm:$0xff]
        %v815 = vld [vmem:[#allocation10 + $0x10] sm:$0xff]
        %v816 = vld [vmem:[#allocation10 + $0x18] sm:$0xff]
        %v817 = vld [vmem:[#allocation12] sm:$0xff]
        %v818 = vld [vmem:[#allocation12 + $0x8] sm:$0xff]
        %v819 = vld [vmem:[#allocation12 + $0x10] sm:$0xff]
        %v820 = vld [vmem:[#allocation12 + $0x18] sm:$0xff]
        %v822 = vsel %vm476, %v817, 0
        %v825 = vsel %vm476, %v818, 0
        %v828 = vsel %vm476, %v819, 0
        %v831 = vsel %vm476, %v820, 0
        %833 = vmatprep.subr.mxu0 0.0
        %834 = vmatpush1.xpose.msra.mxu0 %v822
        %835 = vmatprep.subr.mxu0 0.0
        %836 = vmatpush1.xpose.msra.mxu0 %v825
        %837 = vmatprep.subr.mxu0 0.0
        %838 = vmatpush1.xpose.msra.mxu0 %v828
        %839 = vmatprep.subr.mxu0 0.0
        %840 = vmatpush1.xpose.msra.mxu0 %v831
        %841 = vmatprep.subr.mxu0 0.0
        %842 = vmatpush1.xpose.msra.mxu0 0.0
        %843 = vmatprep.subr.mxu0 0.0
        %844 = vmatpush1.xpose.msra.mxu0 0.0
        %845 = vmatprep.subr.mxu0 0.0
        %846 = vmatpush1.xpose.msra.mxu0 0.0
        %847 = vmatprep.subr.mxu0 0.0
        %848 = vmatpush1.xpose.msra.mxu0 0.0
        %849 = vmatprep.subr.mxu0 0.0
        %850 = vmatpush1.xpose.msra.mxu0 0.0
        %851 = vmatprep.subr.mxu0 0.0
        %852 = vmatpush1.xpose.msra.mxu0 0.0
        %853 = vmatprep.subr.mxu0 0.0
        %854 = vmatpush1.xpose.msra.mxu0 0.0
        %855 = vmatprep.subr.mxu0 0.0
        %856 = vmatpush1.xpose.msra.mxu0 0.0
        %857 = vmatprep.subr.mxu0 0.0
        %858 = vmatpush1.xpose.msra.mxu0 0.0
        %859 = vmatprep.subr.mxu0 0.0
        %860 = vmatpush1.xpose.msra.mxu0 0.0
        %861 = vmatprep.subr.mxu0 0.0
        %862 = vmatpush1.xpose.msra.mxu0 0.0
        %863 = vmatprep.subr.mxu0 0.0
        %864 = vmatpush1.xpose.msra.mxu0 0.0
        %865 = vmatprep.subr.mxu0 0.0
        %866 = vmatpush1.xpose.msra.mxu0 0.0
        %867 = vmatprep.subr.mxu0 0.0
        %868 = vmatpush1.xpose.msra.mxu0 0.0
        %869 = vmatprep.subr.mxu0 0.0
        %870 = vmatpush1.xpose.msra.mxu0 0.0
        %871 = vmatprep.subr.mxu0 0.0
        %872 = vmatpush1.xpose.msra.mxu0 0.0
        %873 = vmatprep.subr.mxu0 0.0
        %874 = vmatpush1.xpose.msra.mxu0 0.0
        %875 = vmatprep.subr.mxu0 0.0
        %876 = vmatpush1.xpose.msra.mxu0 0.0
        %877 = vmatprep.subr.mxu0 0.0
        %878 = vmatpush1.xpose.msra.mxu0 0.0
        %879 = vmatprep.subr.mxu0 0.0
        %880 = vmatpush1.xpose.msra.mxu0 0.0
        %881 = vmatprep.subr.mxu0 0.0
        %882 = vmatpush1.xpose.msra.mxu0 0.0
        %883 = vmatprep.subr.mxu0 0.0
        %884 = vmatpush1.xpose.msra.mxu0 0.0
        %885 = vmatprep.subr.mxu0 0.0
        %886 = vmatpush1.xpose.msra.mxu0 0.0
        %887 = vmatprep.subr.mxu0 0.0
        %888 = vmatpush1.xpose.msra.mxu0 0.0
        %889 = vmatprep.subr.mxu0 0.0
        %890 = vmatpush1.xpose.msra.mxu0 0.0
        %891 = vmatprep.subr.mxu0 0.0
        %892 = vmatpush1.xpose.msra.mxu0 0.0
        %893 = vmatprep.subr.mxu0 0.0
        %894 = vmatpush1.xpose.msra.mxu0 0.0
        %895 = vmatprep.subr.mxu0 0.0
        %896 = vmatpush1.xpose.msra.mxu0 0.0
        %897 = vmatprep.mubr.f32.mxu0 0.0
        %898 = vmatmul.mubr.f32.gmra.mrb[0].mxu0 %v563
        %v899 = vpop.f32.mrb[0].mxu0
        %v900 = vadd.f32 0.0, %v899
        %v901 = vpop.f32.mrb[0].mxu0
        %902 = vdwg.mxu0
        %v904 = vsel %vm476, %v810, 0
        %v907 = vsel %vm476, %v813, 0
        %v910 = vsel %vm476, %v814, 0
        %v913 = vsel %vm476, %v815, 0
        %v916 = vsel %vm476, %v816, 0
        %918 = vmatprep.subr.mxu0 0.0
        %919 = vmatpush1.xpose.msra.mxu0 %v907
        %920 = vmatprep.subr.mxu0 0.0
        %921 = vmatpush1.xpose.msra.mxu0 %v910
        %922 = vmatprep.subr.mxu0 0.0
        %923 = vmatpush1.xpose.msra.mxu0 %v913
        %924 = vmatprep.subr.mxu0 0.0
        %925 = vmatpush1.xpose.msra.mxu0 %v916
        %926 = vmatprep.subr.mxu0 0.0
        %927 = vmatpush1.xpose.msra.mxu0 0.0
        %928 = vmatprep.subr.mxu0 0.0
        %929 = vmatpush1.xpose.msra.mxu0 0.0
        %930 = vmatprep.subr.mxu0 0.0
        %931 = vmatpush1.xpose.msra.mxu0 0.0
        %932 = vmatprep.subr.mxu0 0.0
        %933 = vmatpush1.xpose.msra.mxu0 0.0
        %934 = vmatprep.subr.mxu0 0.0
        %935 = vmatpush1.xpose.msra.mxu0 0.0
        %936 = vmatprep.subr.mxu0 0.0
        %937 = vmatpush1.xpose.msra.mxu0 0.0
        %938 = vmatprep.subr.mxu0 0.0
        %939 = vmatpush1.xpose.msra.mxu0 0.0
        %940 = vmatprep.subr.mxu0 0.0
        %941 = vmatpush1.xpose.msra.mxu0 0.0
        %942 = vmatprep.subr.mxu0 0.0
        %943 = vmatpush1.xpose.msra.mxu0 0.0
        %944 = vmatprep.subr.mxu0 0.0
        %945 = vmatpush1.xpose.msra.mxu0 0.0
        %946 = vmatprep.subr.mxu0 0.0
        %947 = vmatpush1.xpose.msra.mxu0 0.0
        %948 = vmatprep.subr.mxu0 0.0
        %949 = vmatpush1.xpose.msra.mxu0 0.0
        %950 = vmatprep.subr.mxu0 0.0
        %951 = vmatpush1.xpose.msra.mxu0 0.0
        %952 = vmatprep.subr.mxu0 0.0
        %953 = vmatpush1.xpose.msra.mxu0 0.0
        %954 = vmatprep.subr.mxu0 0.0
        %955 = vmatpush1.xpose.msra.mxu0 0.0
        %956 = vmatprep.subr.mxu0 0.0
        %957 = vmatpush1.xpose.msra.mxu0 0.0
        %958 = vmatprep.subr.mxu0 0.0
        %959 = vmatpush1.xpose.msra.mxu0 0.0
        %960 = vmatprep.subr.mxu0 0.0
        %961 = vmatpush1.xpose.msra.mxu0 0.0
        %962 = vmatprep.subr.mxu0 0.0
        %963 = vmatpush1.xpose.msra.mxu0 0.0
        %964 = vmatprep.subr.mxu0 0.0
        %965 = vmatpush1.xpose.msra.mxu0 0.0
        %966 = vmatprep.subr.mxu0 0.0
        %967 = vmatpush1.xpose.msra.mxu0 0.0
        %968 = vmatprep.subr.mxu0 0.0
        %969 = vmatpush1.xpose.msra.mxu0 0.0
        %970 = vmatprep.subr.mxu0 0.0
        %971 = vmatpush1.xpose.msra.mxu0 0.0
        %972 = vmatprep.subr.mxu0 0.0
        %973 = vmatpush1.xpose.msra.mxu0 0.0
        %974 = vmatprep.subr.mxu0 0.0
        %975 = vmatpush1.xpose.msra.mxu0 0.0
        %976 = vmatprep.subr.mxu0 0.0
        %977 = vmatpush1.xpose.msra.mxu0 0.0
        %978 = vmatprep.subr.mxu0 0.0
        %979 = vmatpush1.xpose.msra.mxu0 0.0
        %980 = vmatprep.subr.mxu0 0.0
        %981 = vmatpush1.xpose.msra.mxu0 0.0
        %982 = vmatprep.mubr.f32.mxu0 0.0
        %983 = vmatmul.mubr.f32.gmra.mrb[0].mxu0 %v904
        %v984 = vpop.f32.mrb[0].mxu0
        %v985 = vadd.f32 %v900, %v984
        %v986 = vpop.f32.mrb[0].mxu0
        %987 = vdwg.mxu0
        %v988 = vtanh.pop %v985
        %989 = vst.msk [vmem:[%s456] sm:$0xff] %vm476, %v988
        %v990 = vmul.f32 %v644, %v648
        %991 = vst.msk [vmem:[%s463] sm:$0xff] %vm638, %v990
        %s992 = sand.u32 %s226, 1
        %s993 = scalar_lea.sflag [#allocation4], %s992
        %s994 = sand.u32 %s226, 1
        %s995 = smul.addr %s994, 8
        %s996 = scalar_lea.vmem [#allocation13], %s995
        %s997 = sand.u32 %s252, 1
        %s998 = scalar_lea.sflag [#allocation15], %s997
        %s999 = sand.u32 %s252, 1
        %s1000 = smul.addr %s999, 8
        %s1001 = scalar_lea.vmem [#allocation14], %s1000
        // Predicated region
        $region77: #{tpu_custom_call.1} parent=51 // pred_check
          %p1002 = pneg %p236
        $region78: #{tpu_custom_call.1} parent=51 // pred_check_branch
          %1004 = sbr.rel (%p1002) target = $region80
        $region79: #{tpu_custom_call.1} parent=51 // pred_region
          %s1006 = ssub.s32 128, 128
          %1007 = vsyncadd %s993, %s1006
          %s1008 = smul.addr %s35, 128
          %s1009 = scalar_lea.hbm %s8, %s1008
          %s1011 = sshll.u32 %s996, 4
          %s1012 = int_to_ptr.vmem [resolvable:$true] %s1011
          %1014 = dma.vmem_to_hbm [thread:$0]  %s1012, 128, %s1009, %s993
        $region80: #{tpu_custom_call.1} parent=51 // pred_fallthru
          _
        // Predicated region
        $region81: #{tpu_custom_call.1} parent=51 // pred_check
          %p1015 = pneg %p262
        $region82: #{tpu_custom_call.1} parent=51 // pred_check_branch
          %1017 = sbr.rel (%p1015) target = $region84
        $region83: #{tpu_custom_call.1} parent=51 // pred_region
          %s1019 = ssub.s32 128, 128
          %1020 = vsyncadd %s998, %s1019
          %s1021 = smul.addr %s35, 128
          %s1022 = scalar_lea.hbm %s9, %s1021
          %s1024 = sshll.u32 %s1001, 4
          %s1025 = int_to_ptr.vmem [resolvable:$true] %s1024
          %1027 = dma.vmem_to_hbm [thread:$0]  %s1025, 128, %s1022, %s998
        $region84: #{tpu_custom_call.1} parent=51 // pred_fallthru
          _
      $region52: #{tpu_custom_call.1} parent=5 // pred_fallthru
        _
      %p1028 = scmp.le.s32.totalorder 2, %s30
      // Predicated region
      $region85: #{tpu_custom_call.1} parent=5 // pred_check
        %p1029 = pneg %p1028
      $region86: #{tpu_custom_call.1} parent=5 // pred_check_branch
        %1031 = sbr.rel (%p1029) target = $region88
      $region87: #{tpu_custom_call.1} parent=5 // pred_region
        %s1032 = ssub.s32 %s30, 2
        // Predicated region
        $region89: #{tpu_custom_call.1} parent=87 // pred_check
          %p1033 = pneg %p242
        $region90: #{tpu_custom_call.1} parent=87 // pred_check_branch
          %1035 = sbr.rel (%p1033) target = $region92
        $region91: #{tpu_custom_call.1} parent=87 // pred_region
          %s1036 = sand.u32 %s227, 1
          %s1037 = scalar_lea.sflag [#allocation4], %s1036
          %s1038 = sand.u32 %s227, 1
          %s1039 = smul.addr %s1038, 8
          %s1040 = scalar_lea.vmem [#allocation13], %s1039
          %1041 = dma.done %s1037, 128
        $region92: #{tpu_custom_call.1} parent=87 // pred_fallthru
          _
        // Predicated region
        $region93: #{tpu_custom_call.1} parent=87 // pred_check
          %p1042 = pneg %p268
        $region94: #{tpu_custom_call.1} parent=87 // pred_check_branch
          %1044 = sbr.rel (%p1042) target = $region96
        $region95: #{tpu_custom_call.1} parent=87 // pred_region
          %s1045 = sand.u32 %s253, 1
          %s1046 = scalar_lea.sflag [#allocation15], %s1045
          %s1047 = sand.u32 %s253, 1
          %s1048 = smul.addr %s1047, 8
          %s1049 = scalar_lea.vmem [#allocation14], %s1048
          %1050 = dma.done %s1046, 128
        $region96: #{tpu_custom_call.1} parent=87 // pred_fallthru
          _
      $region88: #{tpu_custom_call.1} parent=5 // pred_fallthru
        _
    $region6: #{tpu_custom_call.1} parent=1 // loop_footer
      %s34 = sadd.s32 1, %s30
    $region7: #{tpu_custom_call.1} parent=1 // loop_footer_branch
      %29 = sbr.rel target = $region3
    $region8: #{tpu_custom_call.1} parent=1 // loop_exit
      _
    %1051 = vsyncpa [#allocation3], 1
    %s1052 = scalar_lea.sflag [#allocation3], 1
    %1053 = vsyncpa %s1052, 1
    %1054 = vsyncpa [#allocation8], 1
    %s1055 = scalar_lea.sflag [#allocation8], 1
    %1056 = vsyncpa %s1055, 1
    %1057 = vsyncpa [#allocation11], 1
    %1058 = vsyncpa [#allocation4], 1
    %s1059 = scalar_lea.sflag [#allocation4], 1
    %1060 = vsyncpa %s1059, 1
    %1061 = vsyncpa [#allocation15], 1
    %s1062 = scalar_lea.sflag [#allocation15], 1
    %1063 = vsyncpa %s1062, 1
    %1064 = vsyncpa [#allocation5], 1
    %s1065 = scalar_lea.sflag [#allocation5], 1
    %1066 = vsyncpa %s1065, 1

</llo_original>
